<compile_context>
chip_gen: v7x
topology: tpu7x:2x2x1
jax: 0.10.0
libtpu: 0.0.40
codegen_flags: <defaults>
</compile_context>

<pallas_src>
import jax
import jax.numpy as jnp
from jax.experimental import pallas as pl
from jax.experimental.pallas import tpu as pltpu


def _round_up(n, m):
    return ((n + m - 1) // m) * m


def _align_for(dim):
    # 256-aligned K/N dims keep the 2x256x256 MXUs (v6e / v7x) fully fed;
    # fall back to the 128-lane minimum so tiny models aren't over-padded
    # (v5e's 4x128x128 MXU is fine with 128 either way).
    return 256 if dim >= 256 else 128


def _tpu_vmem_capacity_bytes():
    try:
        return int(pltpu.get_tpu_info().vmem_capacity_bytes)
    except Exception:
        return 64 * 2**20  # conservative fallback (v7x per-TC VMEM)


# ----------------------------------------------------------------------------
# Kernels
# ----------------------------------------------------------------------------
def ffn_kernel_resident(x_ref, w1_ref, b1_ref, w2_ref, b2_ref, o_ref):
    # Weights fully resident in VMEM: one fused pass per M tile.
    h = jnp.dot(x_ref[...].astype(w1_ref.dtype), w1_ref[...],
                preferred_element_type=jnp.float32)
    h = jnp.maximum(h + b1_ref[...], 0.0)
    # Dropout: identity in eval/inference mode.
    # TODO(synk): training-mode dropout (Bernoulli mask via pltpu.prng_*) not implemented.
    y = jnp.dot(h.astype(w2_ref.dtype), w2_ref[...],
                preferred_element_type=jnp.float32)
    o_ref[...] = (y + b2_ref[...]).astype(o_ref.dtype)


def ffn_kernel_stream(x_ref, w1_ref, b1_ref, w2_ref, b2_ref, o_ref, acc_ref):
    # d_ff streamed as the (innermost) reduction axis; f32 accumulator in VMEM.
    f = pl.program_id(1)
    last = pl.num_programs(1) - 1

    @pl.when(f == 0)
    def _init():
        acc_ref[...] = jnp.zeros_like(acc_ref)

    h = jnp.dot(x_ref[...].astype(w1_ref.dtype), w1_ref[...],
                preferred_element_type=jnp.float32)
    h = jnp.maximum(h + b1_ref[...], 0.0)
    # Dropout: identity in eval/inference mode (see TODO above).
    y = jnp.dot(h.astype(w2_ref.dtype), w2_ref[...],
                preferred_element_type=jnp.float32)

    @pl.when(f < last)
    def _accumulate():
        acc_ref[...] += y

    @pl.when(f == last)
    def _finalize():
        # Fused final step: fold the last partial product straight into the
        # output write (saves one (tm, d_pad) f32 store+load per M tile).
        o_ref[...] = (acc_ref[...] + y + b2_ref[...]).astype(o_ref.dtype)


# ----------------------------------------------------------------------------
# One-time (hoisted) parameter preparation
# ----------------------------------------------------------------------------
def prepare_ffn_params(w1, b1, w2, b2, *, compute_dtype=None, tf_target=2048):
    """torch nn.Linear layout in: w1 [d_ff, D], b1 [d_ff], w2 [D, d_ff], b2 [D].

    Returns transposed, zero-padded, (optionally) bf16-cast weights + tiling info.
    """
    d_ff, D = w1.shape
    dt = jnp.dtype(compute_dtype) if compute_dtype is not None else jnp.dtype(w1.dtype)

    d_pad = _round_up(D, _align_for(D))
    gran = _align_for(d_ff)
    tf = min(_round_up(tf_target, gran), _round_up(d_ff, gran))   # max d_ff tile
    f_pad = _round_up(d_ff, tf)

    w1t = jnp.zeros((d_pad, f_pad), dt).at[:D, :d_ff].set(w1.T.astype(dt))
    w2t = jnp.zeros((f_pad, d_pad), dt).at[:d_ff, :D].set(w2.T.astype(dt))
    b1r = jnp.zeros((1, f_pad), jnp.float32).at[0, :d_ff].set(b1.astype(jnp.float32))
    b2r = jnp.zeros((1, d_pad), jnp.float32).at[0, :D].set(b2.astype(jnp.float32))

    return dict(w1t=w1t, b1=b1r, w2t=w2t, b2=b2r,
                D=D, d_ff=d_ff, d_pad=d_pad, f_pad=f_pad, tf=tf,
                compute_dtype=dt)


# ----------------------------------------------------------------------------
# Forward pass
# ----------------------------------------------------------------------------
def position_wise_feed_forward(x, params, *, tm_target=1024, force_streaming=False):
    """x: [B, S, D]; params from prepare_ffn_params. Returns [B, S, D] in x.dtype."""
    B, S, D = x.shape
    assert D == params["D"], "d_model mismatch with prepared params"
    d_pad, f_pad, tf = params["d_pad"], params["f_pad"], params["tf"]
    w_dt = params["compute_dtype"]
    o_dt = x.dtype

    eb_w = jnp.dtype(w_dt).itemsize
    eb_x = jnp.dtype(x.dtype).itemsize
    eb_o = jnp.dtype(o_dt).itemsize

    M = B * S

    # --- generation-aware VMEM budgeting --------------------------------------
    vmem_cap = _tpu_vmem_capacity_bytes()        # 128 MiB (v5e/v6e) / 64 MiB (v7x)
    vmem_limit = vmem_cap * 3 // 4               # leave compiler headroom
    budget = int(vmem_limit * 0.9)               # margin under the hard limit

    # --- M tiling --------------------------------------------------------------
    if M >= tm_target:
        tm = tm_target
    else:
        tm = max(8, _round_up(M, 8))
    # Guarantee >= 2 parallel M blocks when M is big enough so v7x's two
    # TensorCores (megacore) both get work.
    if pl.cdiv(M, tm) == 1 and M >= 512:
        tm = _round_up(pl.cdiv(M, 2), 128)

    bias_bytes = 2 * (f_pad + d_pad) * 4

    def resident_estimate(tm_):
        return (2 * 2 * d_pad * f_pad * eb_w            # w1 + w2 (double-buffered)
                + 2 * tm_ * d_pad * (eb_x + eb_o)       # x + out tiles (2 bufs each)
                + bias_bytes
                + tm_ * f_pad * 4 + tm_ * d_pad * 4)    # live f32 h, y

    def stream_estimate(tm_, tf_):
        return (2 * tm_ * d_pad * (eb_x + eb_o)         # x + out tiles (2 bufs each)
                + 2 * 2 * tf_ * d_pad * eb_w            # w1 + w2 slabs (2 bufs each)
                + bias_bytes
                + tm_ * d_pad * 4                       # f32 accumulator scratch
                + tm_ * tf_ * 4 + tm_ * d_pad * 4)      # live f32 h, y

    use_fast = (not force_streaming) and resident_estimate(tm) <= budget

    if not use_fast:
        # Shrink tf first (the dominant VMEM term), then tm, with sane floors.
        while stream_estimate(tm, tf) > budget:
            if tf >= 256 and tf % 256 == 0:
                tf //= 2
            elif tm > 128:
                tm = max(128, tm // 2)
            else:
                break
    grid_f = 1 if use_fast else f_pad // tf

    m_pad = _round_up(M, tm)
    grid_m = m_pad // tm

    # --- activations: no extra host passes when already aligned ----------------
    x2d = x.reshape(M, D)
    if m_pad != M or d_pad != D:
        x2d = jnp.pad(x2d, ((0, m_pad - M), (0, d_pad - D)))
    # NOTE: the f32 -> compute_dtype cast of x happens inside the kernel.

    # --- cost estimate (weights stream once per M tile in the streaming path) --
    flops = 4 * M * D * params["d_ff"]
    w_bytes = (params["w1t"].size + params["w2t"].size) * eb_w
    weight_passes = 1 if use_fast else grid_m
    bytes_accessed = (m_pad * d_pad * (eb_x + eb_o)
                      + w_bytes * weight_passes
                      + bias_bytes)

    if use_fast:
        out2d = pl.pallas_call(
            ffn_kernel_resident,
            out_shape=jax.ShapeDtypeStruct((m_pad, d_pad), o_dt),
            grid_spec=pltpu.PrefetchScalarGridSpec(
                num_scalar_prefetch=0,
                grid=(grid_m,),
                in_specs=[
                    pl.BlockSpec((tm, d_pad), lambda i: (i, 0)),      # x tile
                    pl.BlockSpec((d_pad, f_pad), lambda i: (0, 0)),   # w1 (resident)
                    pl.BlockSpec((1, f_pad), lambda i: (0, 0)),       # b1 (resident)
                    pl.BlockSpec((f_pad, d_pad), lambda i: (0, 0)),   # w2 (resident)
                    pl.BlockSpec((1, d_pad), lambda i: (0, 0)),       # b2 (resident)
                ],
                out_specs=pl.BlockSpec((tm, d_pad), lambda i: (i, 0)),
            ),
            compiler_params=pltpu.CompilerParams(
                dimension_semantics=("parallel",),
                vmem_limit_bytes=vmem_limit,
            ),
            cost_estimate=pl.CostEstimate(
                flops=flops, transcendentals=0, bytes_accessed=bytes_accessed),
        )(x2d, params["w1t"], params["b1"], params["w2t"], params["b2"])
    else:
        out2d = pl.pallas_call(
            ffn_kernel_stream,
            out_shape=jax.ShapeDtypeStruct((m_pad, d_pad), o_dt),
            grid_spec=pltpu.PrefetchScalarGridSpec(
                num_scalar_prefetch=0,
                grid=(grid_m, grid_f),
                in_specs=[
                    pl.BlockSpec((tm, d_pad), lambda i, f: (i, 0)),   # x tile
                    pl.BlockSpec((d_pad, tf), lambda i, f: (0, f)),   # w1 slab
                    pl.BlockSpec((1, tf), lambda i, f: (0, f)),       # b1 slab
                    pl.BlockSpec((tf, d_pad), lambda i, f: (f, 0)),   # w2 slab
                    pl.BlockSpec((1, d_pad), lambda i, f: (0, 0)),    # b2 (resident)
                ],
                out_specs=pl.BlockSpec((tm, d_pad), lambda i, f: (i, 0)),
                scratch_shapes=[pltpu.VMEM((tm, d_pad), jnp.float32)],
            ),
            compiler_params=pltpu.CompilerParams(
                dimension_semantics=("parallel", "arbitrary"),
                vmem_limit_bytes=vmem_limit,
            ),
            cost_estimate=pl.CostEstimate(
                flops=flops, transcendentals=0, bytes_accessed=bytes_accessed),
        )(x2d, params["w1t"], params["b1"], params["w2t"], params["b2"])

    if m_pad != M or d_pad != D:
        out2d = out2d[:M, :D]
    return out2d.reshape(B, S, D)


# ----------------------------------------------------------------------------
# Self-test
# ----------------------------------------------------------------------------
def _run_case(key, B, S, D, DFF, *, compute_dtype=None, tf_target=2048,
              force_streaming=False, atol=1e-4, rtol=1e-4):
    kx, k1, k2, k3, k4 = jax.random.split(key, 5)
    x = jax.random.normal(kx, (B, S, D), dtype=jnp.float32)

    bound1 = 1.0 / (D ** 0.5)
    w1 = jax.random.uniform(k1, (DFF, D), jnp.float32, -bound1, bound1)
    b1 = jax.random.uniform(k2, (DFF,), jnp.float32, -bound1, bound1)
    bound2 = 1.0 / (DFF ** 0.5)
    w2 = jax.random.uniform(k3, (D, DFF), jnp.float32, -bound2, bound2)
    b2 = jax.random.uniform(k4, (D,), jnp.float32, -bound2, bound2)

    # Pure-JAX reference (eval-mode dropout == identity).
    ref = jnp.maximum(x @ w1.T + b1, 0.0) @ w2.T + b2

    params = prepare_ffn_params(w1, b1, w2, b2, compute_dtype=compute_dtype,
                                tf_target=tf_target)               # prepared once
    out = jax.block_until_ready(
        position_wise_feed_forward(x, params, force_streaming=force_streaming))
    assert out.shape == (B, S, D)
    ok = jnp.allclose(out.astype(jnp.float32), ref, atol=atol, rtol=rtol)
    assert bool(ok), f"mismatch (D={D}, DFF={DFF}, dtype={compute_dtype})"


if __name__ == "__main__":
    key = jax.random.PRNGKey(0)
    k1, k2, k3, k4 = jax.random.split(key, 4)

    # 1) f32, resident-weights fast path (module scaled down: d_model=32, d_ff=64).
    _run_case(k1, 2, 8, 32, 64)

    # 2) f32, streaming (d_ff reduction) path forced, single f step.
    _run_case(k2, 2, 8, 32, 64, tf_target=128, force_streaming=True)

    # 3) f32, streaming path with 2 reduction steps (exercises the accumulator).
    _run_case(k3, 2, 8, 128, 512, tf_target=256, force_streaming=True,
              atol=5e-3, rtol=5e-3)

    # 4) bf16 weights / bf16 matmul inputs with f32 accumulation (v6e/v7x path).
    _run_case(k4, 2, 8, 32, 64, compute_dtype=jnp.bfloat16, atol=0.1, rtol=0.1)

    print("KERNEL_OK")
</pallas_src>

<mosaic_0001>
module attributes {stable_mosaic.version = 11 : i64} {
  func.func @ffn_kernel_resident(%arg0: i32, %arg1: memref<16x128xf32, #tpu.memory_space<vmem>>, %arg2: memref<128x128xf32, #tpu.memory_space<vmem>>, %arg3: memref<1x128xf32, #tpu.memory_space<vmem>>, %arg4: memref<128x128xf32, #tpu.memory_space<vmem>>, %arg5: memref<1x128xf32, #tpu.memory_space<vmem>>, %arg6: memref<16x128xf32, #tpu.memory_space<vmem>>) attributes {dimension_semantics = [#tpu.dimension_semantics<parallel>], iteration_bounds = array<i64: 1>, scalar_prefetch = 0 : i64, scratch_operands = 0 : i64, tpu.core_type = #tpu.core_type<tc>, window_params = [{transform_indices = @transform_0, window_bounds = array<i64: 16, 128>}, {pipeline_mode = #tpu.pipeline_mode<synchronous>, transform_indices = @transform_1, window_bounds = array<i64: 128, 128>}, {pipeline_mode = #tpu.pipeline_mode<synchronous>, transform_indices = @transform_2, window_bounds = array<i64: 1, 128>}, {pipeline_mode = #tpu.pipeline_mode<synchronous>, transform_indices = @transform_3, window_bounds = array<i64: 128, 128>}, {pipeline_mode = #tpu.pipeline_mode<synchronous>, transform_indices = @transform_4, window_bounds = array<i64: 1, 128>}, {transform_indices = @transform_5, window_bounds = array<i64: 16, 128>}]} {
    %c0 = arith.constant 0 : index
    %c0_0 = arith.constant 0 : index
    %0 = vector.load %arg1[%c0, %c0_0] : memref<16x128xf32, #tpu.memory_space<vmem>>, vector<16x128xf32>
    %c0_1 = arith.constant 0 : index
    %c0_2 = arith.constant 0 : index
    %1 = vector.load %arg2[%c0_1, %c0_2] : memref<128x128xf32, #tpu.memory_space<vmem>>, vector<128x128xf32>
    %cst = arith.constant dense<0.000000e+00> : vector<16x128xf32>
    %2 = tpu.matmul %0, %1, %cst {dimension_numbers = #tpu.dot_dimension_numbers<[1], [0], [0], [1], [0, 0, 1, 1], [], []>} : vector<16x128xf32>, vector<128x128xf32>, vector<16x128xf32> -> vector<16x128xf32>
    %c0_3 = arith.constant 0 : index
    %c0_4 = arith.constant 0 : index
    %3 = vector.load %arg3[%c0_3, %c0_4] : memref<1x128xf32, #tpu.memory_space<vmem>>, vector<1x128xf32>
    %4 = vector.broadcast %3 : vector<1x128xf32> to vector<16x128xf32>
    %5 = arith.addf %2, %4 : vector<16x128xf32>
    %cst_5 = arith.constant 0.000000e+00 : f32
    %6 = vector.broadcast %cst_5 : f32 to vector<16x128xf32>
    %7 = arith.maximumf %5, %6 : vector<16x128xf32>
    %c0_6 = arith.constant 0 : index
    %c0_7 = arith.constant 0 : index
    %8 = vector.load %arg4[%c0_6, %c0_7] : memref<128x128xf32, #tpu.memory_space<vmem>>, vector<128x128xf32>
    %cst_8 = arith.constant dense<0.000000e+00> : vector<16x128xf32>
    %9 = tpu.matmul %7, %8, %cst_8 {dimension_numbers = #tpu.dot_dimension_numbers<[1], [0], [0], [1], [0, 0, 1, 1], [], []>} : vector<16x128xf32>, vector<128x128xf32>, vector<16x128xf32> -> vector<16x128xf32>
    %c0_9 = arith.constant 0 : index
    %c0_10 = arith.constant 0 : index
    %10 = vector.load %arg5[%c0_9, %c0_10] : memref<1x128xf32, #tpu.memory_space<vmem>>, vector<1x128xf32>
    %11 = vector.broadcast %10 : vector<1x128xf32> to vector<16x128xf32>
    %12 = arith.addf %9, %11 : vector<16x128xf32>
    %c0_11 = arith.constant 0 : index
    %c0_12 = arith.constant 0 : index
    %13 = vector.load %arg6[%c0_11, %c0_12] : memref<16x128xf32, #tpu.memory_space<vmem>>, vector<16x128xf32>
    tpu.vector_store %arg6[%c0_11, %c0_12], %12 {strides = array<i32>} : memref<16x128xf32, #tpu.memory_space<vmem>>, vector<16x128xf32>,
    return
  }
  func.func @transform_0(%arg0: i32) -> (i32, i32) {
    %c0_i32 = arith.constant 0 : i32
    %c0_i32_0 = arith.constant 0 : i32
    return %arg0, %c0_i32 : i32, i32
  }
  func.func @transform_1(%arg0: i32) -> (i32, i32) {
    %c0_i32 = arith.constant 0 : i32
    %c0_i32_0 = arith.constant 0 : i32
    %c0_i32_1 = arith.constant 0 : i32
    return %c0_i32, %c0_i32_0 : i32, i32
  }
  func.func @transform_2(%arg0: i32) -> (i32, i32) {
    %c0_i32 = arith.constant 0 : i32
    %c0_i32_0 = arith.constant 0 : i32
    %c0_i32_1 = arith.constant 0 : i32
    return %c0_i32, %c0_i32_0 : i32, i32
  }
  func.func @transform_3(%arg0: i32) -> (i32, i32) {
    %c0_i32 = arith.constant 0 : i32
    %c0_i32_0 = arith.constant 0 : i32
    %c0_i32_1 = arith.constant 0 : i32
    return %c0_i32, %c0_i32_0 : i32, i32
  }
  func.func @transform_4(%arg0: i32) -> (i32, i32) {
    %c0_i32 = arith.constant 0 : i32
    %c0_i32_0 = arith.constant 0 : i32
    %c0_i32_1 = arith.constant 0 : i32
    return %c0_i32, %c0_i32_0 : i32, i32
  }
  func.func @transform_5(%arg0: i32) -> (i32, i32) {
    %c0_i32 = arith.constant 0 : i32
    %c0_i32_0 = arith.constant 0 : i32
    return %arg0, %c0_i32 : i32, i32
  }
}

</mosaic_0001>

<llo_original>
// kernel: tpu_custom_call.1
$region0: #{tpu_custom_call.1}
  #allocation0 [shape = 'u32[]', space=smem, size = 0x4, offset = 0x4, fixed_abs, tag = 'smem constant byte address 0x4 - core index']
  #allocation1 [shape = 'u32[144,128]{1,0:T(1,128)}', space=vmem, size = 0x12000, scoped, tag = 'internal scratch']
  %s0 = inlined_call_operand.hbm [shape: f32[16,128], index: 0, kind: input, shape index: {}]
  %s1 = inlined_call_operand.hbm [shape: f32[128,128], index: 1, kind: input, shape index: {}]
  %s2 = inlined_call_operand.vmem [shape: f32[1,128], index: 2, kind: input, shape index: {}]
  %s3 = inlined_call_operand.hbm [shape: f32[128,128], index: 3, kind: input, shape index: {}]
  %s4 = inlined_call_operand.vmem [shape: f32[1,128], index: 4, kind: input, shape index: {}]
  %s5 = inlined_call_operand.hbm [shape: f32[16,128], index: 5, kind: output, shape index: {}]
  %s6 = sld [smem:[#allocation0]]
  $region42: #{tpu_custom_call.1} parent=0
    _
  %s8 = ssub.s32 1, %s6
  %s9 = scalar_select 0, %s8, %s6
  $region1: #{tpu_custom_call.1} parent=0
    #allocation2 [shape = 'u8[8192]{0}', space=vmem, size = 0x2000, scoped, tag = 'input window, operand 0, single buffered']
    #allocation3 [shape = 's32[1]{0}', space=sflag, size = 0x4, scoped, tag = 'scoped memory for tpu_custom_call.1']
    #allocation4 [shape = 's32[1]{0}', space=sflag, size = 0x4, scoped, tag = 'scoped memory for tpu_custom_call.1']
    #allocation5 [shape = 'u8[65536]{0}', space=vmem, size = 0x10000, scoped, tag = 'input window, operand 1, single buffered']
    #allocation6 [shape = 's32[1]{0}', space=sflag, size = 0x4, scoped, tag = 'scoped memory for tpu_custom_call.1']
    #allocation7 [shape = 'u8[65536]{0}', space=vmem, size = 0x10000, scoped, tag = 'input window, operand 3, single buffered']
    #allocation8 [shape = 'u8[8192]{0}', space=vmem, size = 0x2000, scoped, tag = 'output window, operand 0, single buffered']
    %10 = vsyncpa [#allocation3], 0
    %11 = vsyncpa [#allocation6], 0
    %12 = vsyncpa [#allocation4], 0
    // Predicated region
    $region2: #{tpu_custom_call.1} parent=1 // pred_check
      _
    $region3: #{tpu_custom_call.1} parent=1 // pred_check_branch
      %14 = sbr.rel (0) target = $region5
    $region4: #{tpu_custom_call.1} parent=1 // pred_region
      %s16 = ssub.s32 256, 256
      %17 = vsyncadd [#allocation3], %s16
      %s18 = sshll.u32 [#allocation2], 4
      %s19 = int_to_ptr.vmem [resolvable:$true] %s18
      %24 = dma.hbm_to_vmem [thread:$0]  %s0, 256, %s19, [#allocation3], 128, 128, 8
    $region5: #{tpu_custom_call.1} parent=1 // pred_fallthru
      _
    // Predicated region
    $region6: #{tpu_custom_call.1} parent=1 // pred_check
      _
    $region7: #{tpu_custom_call.1} parent=1 // pred_check_branch
      %26 = sbr.rel (0) target = $region9
    $region8: #{tpu_custom_call.1} parent=1 // pred_region
      %s28 = ssub.s32 2048, 2048
      %29 = vsyncadd [#allocation6], %s28
      %s30 = sshll.u32 [#allocation5], 4
      %s31 = int_to_ptr.vmem [resolvable:$true] %s30
      %36 = dma.hbm_to_vmem [thread:$0]  %s1, 2048, %s31, [#allocation6], 128, 128, 8
    $region9: #{tpu_custom_call.1} parent=1 // pred_fallthru
      _
    // Predicated region
    $region10: #{tpu_custom_call.1} parent=1 // pred_check
      _
    $region11: #{tpu_custom_call.1} parent=1 // pred_check_branch
      %38 = sbr.rel (0) target = $region13
    $region12: #{tpu_custom_call.1} parent=1 // pred_region
      _
    $region13: #{tpu_custom_call.1} parent=1 // pred_fallthru
      _
    // Predicated region
    $region14: #{tpu_custom_call.1} parent=1 // pred_check
      _
    $region15: #{tpu_custom_call.1} parent=1 // pred_check_branch
      %40 = sbr.rel (0) target = $region17
    $region16: #{tpu_custom_call.1} parent=1 // pred_region
      %s42 = ssub.s32 2048, 2048
      %43 = vsyncadd [#allocation6], %s42
      %s44 = sshll.u32 [#allocation7], 4
      %s45 = int_to_ptr.vmem [resolvable:$true] %s44
      %50 = dma.hbm_to_vmem [thread:$0]  %s3, 2048, %s45, [#allocation6], 128, 128, 8
    $region17: #{tpu_custom_call.1} parent=1 // pred_fallthru
      _
    // Predicated region
    $region18: #{tpu_custom_call.1} parent=1 // pred_check
      _
    $region19: #{tpu_custom_call.1} parent=1 // pred_check_branch
      %52 = sbr.rel (0) target = $region21
    $region20: #{tpu_custom_call.1} parent=1 // pred_region
      _
    $region21: #{tpu_custom_call.1} parent=1 // pred_fallthru
      _
    // Predicated region
    $region22: #{tpu_custom_call.1} parent=1 // pred_check
      _
    $region23: #{tpu_custom_call.1} parent=1 // pred_check_branch
      %54 = sbr.rel (0) target = $region25
    $region24: #{tpu_custom_call.1} parent=1 // pred_region
      %55 = dma.done [#allocation3], 256
    $region25: #{tpu_custom_call.1} parent=1 // pred_fallthru
      _
    // Predicated region
    $region26: #{tpu_custom_call.1} parent=1 // pred_check
      _
    $region27: #{tpu_custom_call.1} parent=1 // pred_check_branch
      %57 = sbr.rel (0) target = $region29
    $region28: #{tpu_custom_call.1} parent=1 // pred_region
      %58 = dma.done [#allocation6], 2048
    $region29: #{tpu_custom_call.1} parent=1 // pred_fallthru
      _
    // Predicated region
    $region30: #{tpu_custom_call.1} parent=1 // pred_check
      _
    $region31: #{tpu_custom_call.1} parent=1 // pred_check_branch
      %60 = sbr.rel (0) target = $region33
    $region32: #{tpu_custom_call.1} parent=1 // pred_region
      %61 = dma.done [#allocation6], 2048
    $region33: #{tpu_custom_call.1} parent=1 // pred_fallthru
      _
    %v62 = vld [vmem:[#allocation2] sm:$0xff]
    %v63 = vld [vmem:[#allocation2 + $0x8] sm:$0xff]
    %v64 = vld [vmem:[#allocation5] sm:$0xff]
    %v65 = vld [vmem:[#allocation5 + $0x8] sm:$0xff]
    %v66 = vld [vmem:[#allocation5 + $0x10] sm:$0xff]
    %v67 = vld [vmem:[#allocation5 + $0x18] sm:$0xff]
    %v68 = vld [vmem:[#allocation5 + $0x20] sm:$0xff]
    %v69 = vld [vmem:[#allocation5 + $0x28] sm:$0xff]
    %v70 = vld [vmem:[#allocation5 + $0x30] sm:$0xff]
    %v71 = vld [vmem:[#allocation5 + $0x38] sm:$0xff]
    %v72 = vld [vmem:[#allocation5 + $0x40] sm:$0xff]
    %v73 = vld [vmem:[#allocation5 + $0x48] sm:$0xff]
    %v74 = vld [vmem:[#allocation5 + $0x50] sm:$0xff]
    %v75 = vld [vmem:[#allocation5 + $0x58] sm:$0xff]
    %v76 = vld [vmem:[#allocation5 + $0x60] sm:$0xff]
    %v77 = vld [vmem:[#allocation5 + $0x68] sm:$0xff]
    %v78 = vld [vmem:[#allocation5 + $0x70] sm:$0xff]
    %v79 = vld [vmem:[#allocation5 + $0x78] sm:$0xff]
    %v80 = vld [vmem:[%s2] sm:$0x1]
    %v82 = vlaneseq
    %v83 = vshrl.u32 %v82, 7
    %v84 = vsub.s32 0, %v83
    %v85 = vrot.slane %v80, %v84
    %87 = vmatprep.subr.mxu0 0.0
    %88 = vmatpush1.msra.mxu0 %v64
    %89 = vmatprep.subr.mxu0 0.0
    %90 = vmatpush1.msra.mxu0 %v65
    %91 = vmatprep.subr.mxu0 0.0
    %92 = vmatpush1.msra.mxu0 %v66
    %93 = vmatprep.subr.mxu0 0.0
    %94 = vmatpush1.msra.mxu0 %v67
    %95 = vmatprep.subr.mxu0 0.0
    %96 = vmatpush1.msra.mxu0 %v68
    %97 = vmatprep.subr.mxu0 0.0
    %98 = vmatpush1.msra.mxu0 %v69
    %99 = vmatprep.subr.mxu0 0.0
    %100 = vmatpush1.msra.mxu0 %v70
    %101 = vmatprep.subr.mxu0 0.0
    %102 = vmatpush1.msra.mxu0 %v71
    %103 = vmatprep.subr.mxu0 0.0
    %104 = vmatpush1.msra.mxu0 %v72
    %105 = vmatprep.subr.mxu0 0.0
    %106 = vmatpush1.msra.mxu0 %v73
    %107 = vmatprep.subr.mxu0 0.0
    %108 = vmatpush1.msra.mxu0 %v74
    %109 = vmatprep.subr.mxu0 0.0
    %110 = vmatpush1.msra.mxu0 %v75
    %111 = vmatprep.subr.mxu0 0.0
    %112 = vmatpush1.msra.mxu0 %v76
    %113 = vmatprep.subr.mxu0 0.0
    %114 = vmatpush1.msra.mxu0 %v77
    %115 = vmatprep.subr.mxu0 0.0
    %116 = vmatpush1.msra.mxu0 %v78
    %117 = vmatprep.subr.mxu0 0.0
    %118 = vmatpush1.msra.mxu0 %v79
    %119 = vmatprep.subr.mxu0 0.0
    %120 = vmatpush1.msra.mxu0 0.0
    %121 = vmatprep.subr.mxu0 0.0
    %122 = vmatpush1.msra.mxu0 0.0
    %123 = vmatprep.subr.mxu0 0.0
    %124 = vmatpush1.msra.mxu0 0.0
    %125 = vmatprep.subr.mxu0 0.0
    %126 = vmatpush1.msra.mxu0 0.0
    %127 = vmatprep.subr.mxu0 0.0
    %128 = vmatpush1.msra.mxu0 0.0
    %129 = vmatprep.subr.mxu0 0.0
    %130 = vmatpush1.msra.mxu0 0.0
    %131 = vmatprep.subr.mxu0 0.0
    %132 = vmatpush1.msra.mxu0 0.0
    %133 = vmatprep.subr.mxu0 0.0
    %134 = vmatpush1.msra.mxu0 0.0
    %135 = vmatprep.subr.mxu0 0.0
    %136 = vmatpush1.msra.mxu0 0.0
    %137 = vmatprep.subr.mxu0 0.0
    %138 = vmatpush1.msra.mxu0 0.0
    %139 = vmatprep.subr.mxu0 0.0
    %140 = vmatpush1.msra.mxu0 0.0
    %141 = vmatprep.subr.mxu0 0.0
    %142 = vmatpush1.msra.mxu0 0.0
    %143 = vmatprep.subr.mxu0 0.0
    %144 = vmatpush1.msra.mxu0 0.0
    %145 = vmatprep.subr.mxu0 0.0
    %146 = vmatpush1.msra.mxu0 0.0
    %147 = vmatprep.subr.mxu0 0.0
    %148 = vmatpush1.msra.mxu0 0.0
    %149 = vmatprep.subr.mxu0 0.0
    %150 = vmatpush1.msra.mxu0 0.0
    %151 = vmatprep.mubr.f32.mxu0 0.0
    %152 = vmatmul.mubr.f32.gmra.mrb[0].mxu0 %v62
    %v153 = vpop.f32.mrb[0].mxu0
    %v154 = vadd.f32 %v85, %v153
    %v155 = vpop.f32.mrb[0].mxu0
    %156 = vmatprep.mubr.f32.mxu0 0.0
    %157 = vmatmul.mubr.f32.gmra.mrb[0].mxu0 %v63
    %v158 = vpop.f32.mrb[0].mxu0
    %v159 = vadd.f32 %v85, %v158
    %v160 = vpop.f32.mrb[0].mxu0
    %161 = vdwg.mxu0
    %v162 = vmax.f32 %v154, 0.0
    %v163 = vmax.f32 %v159, 0.0
    %v164 = vld [vmem:[#allocation7] sm:$0xff]
    %v165 = vld [vmem:[#allocation7 + $0x8] sm:$0xff]
    %v166 = vld [vmem:[#allocation7 + $0x10] sm:$0xff]
    %v167 = vld [vmem:[#allocation7 + $0x18] sm:$0xff]
    %v168 = vld [vmem:[#allocation7 + $0x20] sm:$0xff]
    %v169 = vld [vmem:[#allocation7 + $0x28] sm:$0xff]
    %v170 = vld [vmem:[#allocation7 + $0x30] sm:$0xff]
    %v171 = vld [vmem:[#allocation7 + $0x38] sm:$0xff]
    %v172 = vld [vmem:[#allocation7 + $0x40] sm:$0xff]
    %v173 = vld [vmem:[#allocation7 + $0x48] sm:$0xff]
    %v174 = vld [vmem:[#allocation7 + $0x50] sm:$0xff]
    %v175 = vld [vmem:[#allocation7 + $0x58] sm:$0xff]
    %v176 = vld [vmem:[#allocation7 + $0x60] sm:$0xff]
    %v177 = vld [vmem:[#allocation7 + $0x68] sm:$0xff]
    %v178 = vld [vmem:[#allocation7 + $0x70] sm:$0xff]
    %v179 = vld [vmem:[#allocation7 + $0x78] sm:$0xff]
    %v180 = vld [vmem:[%s4] sm:$0x1]
    %v182 = vlaneseq
    %v183 = vshrl.u32 %v182, 7
    %v184 = vsub.s32 0, %v183
    %v185 = vrot.slane %v180, %v184
    %187 = vmatprep.subr.mxu0 0.0
    %188 = vmatpush1.msra.mxu0 %v164
    %189 = vmatprep.subr.mxu0 0.0
    %190 = vmatpush1.msra.mxu0 %v165
    %191 = vmatprep.subr.mxu0 0.0
    %192 = vmatpush1.msra.mxu0 %v166
    %193 = vmatprep.subr.mxu0 0.0
    %194 = vmatpush1.msra.mxu0 %v167
    %195 = vmatprep.subr.mxu0 0.0
    %196 = vmatpush1.msra.mxu0 %v168
    %197 = vmatprep.subr.mxu0 0.0
    %198 = vmatpush1.msra.mxu0 %v169
    %199 = vmatprep.subr.mxu0 0.0
    %200 = vmatpush1.msra.mxu0 %v170
    %201 = vmatprep.subr.mxu0 0.0
    %202 = vmatpush1.msra.mxu0 %v171
    %203 = vmatprep.subr.mxu0 0.0
    %204 = vmatpush1.msra.mxu0 %v172
    %205 = vmatprep.subr.mxu0 0.0
    %206 = vmatpush1.msra.mxu0 %v173
    %207 = vmatprep.subr.mxu0 0.0
    %208 = vmatpush1.msra.mxu0 %v174
    %209 = vmatprep.subr.mxu0 0.0
    %210 = vmatpush1.msra.mxu0 %v175
    %211 = vmatprep.subr.mxu0 0.0
    %212 = vmatpush1.msra.mxu0 %v176
    %213 = vmatprep.subr.mxu0 0.0
    %214 = vmatpush1.msra.mxu0 %v177
    %215 = vmatprep.subr.mxu0 0.0
    %216 = vmatpush1.msra.mxu0 %v178
    %217 = vmatprep.subr.mxu0 0.0
    %218 = vmatpush1.msra.mxu0 %v179
    %219 = vmatprep.subr.mxu0 0.0
    %220 = vmatpush1.msra.mxu0 0.0
    %221 = vmatprep.subr.mxu0 0.0
    %222 = vmatpush1.msra.mxu0 0.0
    %223 = vmatprep.subr.mxu0 0.0
    %224 = vmatpush1.msra.mxu0 0.0
    %225 = vmatprep.subr.mxu0 0.0
    %226 = vmatpush1.msra.mxu0 0.0
    %227 = vmatprep.subr.mxu0 0.0
    %228 = vmatpush1.msra.mxu0 0.0
    %229 = vmatprep.subr.mxu0 0.0
    %230 = vmatpush1.msra.mxu0 0.0
    %231 = vmatprep.subr.mxu0 0.0
    %232 = vmatpush1.msra.mxu0 0.0
    %233 = vmatprep.subr.mxu0 0.0
    %234 = vmatpush1.msra.mxu0 0.0
    %235 = vmatprep.subr.mxu0 0.0
    %236 = vmatpush1.msra.mxu0 0.0
    %237 = vmatprep.subr.mxu0 0.0
    %238 = vmatpush1.msra.mxu0 0.0
    %239 = vmatprep.subr.mxu0 0.0
    %240 = vmatpush1.msra.mxu0 0.0
    %241 = vmatprep.subr.mxu0 0.0
    %242 = vmatpush1.msra.mxu0 0.0
    %243 = vmatprep.subr.mxu0 0.0
    %244 = vmatpush1.msra.mxu0 0.0
    %245 = vmatprep.subr.mxu0 0.0
    %246 = vmatpush1.msra.mxu0 0.0
    %247 = vmatprep.subr.mxu0 0.0
    %248 = vmatpush1.msra.mxu0 0.0
    %249 = vmatprep.subr.mxu0 0.0
    %250 = vmatpush1.msra.mxu0 0.0
    %251 = vmatprep.mubr.f32.mxu0 0.0
    %252 = vmatmul.mubr.f32.gmra.mrb[0].mxu0 %v162
    %v253 = vpop.f32.mrb[0].mxu0
    %v254 = vadd.f32 %v185, %v253
    %v255 = vpop.f32.mrb[0].mxu0
    %256 = vmatprep.mubr.f32.mxu0 0.0
    %257 = vmatmul.mubr.f32.gmra.mrb[0].mxu0 %v163
    %v258 = vpop.f32.mrb[0].mxu0
    %v259 = vadd.f32 %v185, %v258
    %v260 = vpop.f32.mrb[0].mxu0
    %261 = vdwg.mxu0
    %262 = vst [vmem:[#allocation8] sm:$0xff] %v254
    %263 = vst [vmem:[#allocation8 + $0x8] sm:$0xff] %v259
    // Predicated region
    $region34: #{tpu_custom_call.1} parent=1 // pred_check
      _
    $region35: #{tpu_custom_call.1} parent=1 // pred_check_branch
      %265 = sbr.rel (0) target = $region37
    $region36: #{tpu_custom_call.1} parent=1 // pred_region
      %s267 = ssub.s32 256, 256
      %268 = vsyncadd [#allocation4], %s267
      %s269 = sshll.u32 [#allocation8], 4
      %s270 = int_to_ptr.vmem [resolvable:$true] %s269
      %275 = dma.vmem_to_hbm [thread:$0]  %s270, 256, %s5, [#allocation4], 128, 128, 8
    $region37: #{tpu_custom_call.1} parent=1 // pred_fallthru
      _
    // Predicated region
    $region38: #{tpu_custom_call.1} parent=1 // pred_check
      _
    $region39: #{tpu_custom_call.1} parent=1 // pred_check_branch
      %277 = sbr.rel (0) target = $region41
    $region40: #{tpu_custom_call.1} parent=1 // pred_region
      %278 = dma.done [#allocation4], 256
    $region41: #{tpu_custom_call.1} parent=1 // pred_fallthru
      _
    %279 = vsyncpa [#allocation3], 1
    %280 = vsyncpa [#allocation6], 1
    %281 = vsyncpa [#allocation4], 1

</llo_original>
